<compile_context>
chip_gen: v5e
topology: v5e:2x2
jax: 0.10.0
libtpu: 0.0.40
codegen_flags: <defaults>
</compile_context>

<pallas_src>
import functools

import jax
import jax.numpy as jnp
from jax.experimental import pallas as pl
from jax.experimental.pallas import tpu as pltpu

_LANE_CHOICES = (1024, 512, 256, 128)
_TARGET_TILE_BYTES = 4 << 20   # ~4 MiB of streamed data per tile
_VMEM_LIMIT_BYTES = 40 << 20   # fits v7x's 64 MiB/TC; lifts v5e/v6e scoped defaults


def _mg_prng_kernel(seed_ref, scale_ref, x_ref, o_ref):
    # Seed per grid tile so every tile / TensorCore draws distinct noise.
    pltpu.prng_seed(seed_ref[0], pl.program_id(0))
    eps = pltpu.stateful_normal(x_ref.shape, jnp.float32)
    x = x_ref[...].astype(jnp.float32)
    o_ref[...] = (x * (1.0 + scale_ref[0] * eps)).astype(o_ref.dtype)


def _mg_noise_kernel(scale_ref, x_ref, eps_ref, o_ref):
    x = x_ref[...].astype(jnp.float32)
    o_ref[...] = (x * (1.0 + scale_ref[0] * eps_ref[...])).astype(o_ref.dtype)


def _slab_geometry(n):
    """Pick a lane-dense (rows, lane) view of the flattened input; pad only if ragged."""
    for lane in _LANE_CHOICES:
        if n % lane == 0:
            return n // lane, lane, 0
    lane = 1024  # ragged: pad to the widest lane so stores stay unmasked/wide
    pad = (-n) % lane
    return (n + pad) // lane, lane, pad


def _block_rows(rows, lane, itemsize):
    """Rows per tile: ~4 MiB of streamed data, multiple of 32 sublanes, >=2 grid steps."""
    target = max(32, (_TARGET_TILE_BYTES // (lane * itemsize)) // 32 * 32)
    # Guarantee at least 2 grid steps when rows permit, so the "parallel" grid axis can
    # shard across v7x's two TensorCores instead of collapsing to grid=(1,).
    if rows >= 64:
        half = (((rows + 1) // 2) + 31) // 32 * 32
        target = min(target, half)
    return rows if target >= rows else target


@functools.partial(jax.jit, static_argnames=("training",))
def multiplicative_gaussian(x, mu, logsigma, seed, training=True):
    """JAX/Pallas equivalent of MultiplicativeGaussian.forward (parametric_noise=False)."""
    if not training:
        return x

    orig_shape = x.shape
    orig_dtype = x.dtype
    n = x.size

    rows, lane, pad = _slab_geometry(n)
    flat = jnp.ravel(x)
    if pad:
        # Rare ragged path only; materializes one padded copy of x.
        flat = jnp.pad(flat, (0, pad))
    slab = flat.reshape(rows, lane)

    itemsize = jnp.dtype(orig_dtype).itemsize  # size tiles by the actual streamed bytes
    br = _block_rows(rows, lane, itemsize)
    grid = (pl.cdiv(rows, br),)

    tile_spec = pl.BlockSpec((br, lane), lambda i: (i, 0))
    smem_spec = pl.BlockSpec(memory_space=pltpu.SMEM)

    # Fold the scalars once: scale = exp(logsigma) / mu.
    scale = (jnp.exp(jnp.asarray(logsigma, jnp.float32))
             / jnp.asarray(mu, jnp.float32)).reshape(1)

    if jax.default_backend() == "tpu":
        seed_arr = jnp.asarray(seed, jnp.int32).reshape(1)
        out_slab = pl.pallas_call(
            _mg_prng_kernel,
            out_shape=jax.ShapeDtypeStruct(slab.shape, orig_dtype),
            grid=grid,
            in_specs=[smem_spec, smem_spec, tile_spec],
            out_specs=tile_spec,
            compiler_params=pltpu.CompilerParams(
                dimension_semantics=("parallel",),      # megacore split on v7x
                vmem_limit_bytes=_VMEM_LIMIT_BYTES),    # room for 4 MiB double-buffered tiles
        )(seed_arr, scale, slab)
    else:
        # TODO(synk): pltpu.prng_seed / pltpu.stateful_normal have no non-TPU lowering;
        # on other backends stream precomputed N(0,1) noise through the same tiled kernel.
        key = jax.random.PRNGKey(jnp.asarray(seed, jnp.int32))
        eps = jax.random.normal(key, slab.shape, jnp.float32)
        out_slab = pl.pallas_call(
            _mg_noise_kernel,
            out_shape=jax.ShapeDtypeStruct(slab.shape, orig_dtype),
            grid=grid,
            in_specs=[smem_spec, tile_spec, tile_spec],
            out_specs=tile_spec,
        )(scale, slab, eps)

    out = out_slab.reshape(-1)
    if pad:
        out = out[:n]
    return out.reshape(orig_shape)


if __name__ == "__main__":
    key = jax.random.PRNGKey(0)

    # Small NCHW input, consistent with a conv-style activation tensor.
    B, C, H, W = 2, 4, 16, 16
    x = jax.random.normal(key, (B, C, H, W), dtype=jnp.float32)

    # Deterministic parameter init matching the module's __init__.
    mu = jnp.float32(1.0)
    logsigma = jnp.float32(-2.0)
    seed = 1234

    # Training mode: noisy output.
    y = multiplicative_gaussian(x, mu, logsigma, seed, training=True)
    y = jax.block_until_ready(y)
    assert y.shape == x.shape and y.dtype == x.dtype
    assert bool(jnp.all(jnp.isfinite(y)))

    # Sanity on the noise statistics: y/x - 1 = scale * eps with scale = exp(-2) ~ 0.135.
    ratio = (y / jnp.where(jnp.abs(x) > 1e-6, x, 1.0)) - 1.0
    r_mean = float(jnp.mean(ratio))
    r_std = float(jnp.std(ratio))
    assert abs(r_mean) < 0.05, r_mean
    assert 0.08 < r_std < 0.20, r_std

    # Eval mode: identity passthrough (module returns x when not training).
    y_eval = multiplicative_gaussian(x, mu, logsigma, seed, training=False)
    y_eval = jax.block_until_ready(y_eval)
    assert bool(jnp.all(y_eval == x))

    print("KERNEL_OK")
</pallas_src>

<mosaic_0001>
module attributes {stable_mosaic.version = 11 : i64} {
  func.func @_mg_noise_kernel(%arg0: i32, %arg1: memref<1xf32, #tpu.memory_space<smem>>, %arg2: memref<2x1024xf32, #tpu.memory_space<vmem>>, %arg3: memref<2x1024xf32, #tpu.memory_space<vmem>>, %arg4: memref<2x1024xf32, #tpu.memory_space<vmem>>) attributes {dimension_semantics = [#tpu.dimension_semantics<arbitrary>], iteration_bounds = array<i64: 1>, scalar_prefetch = 0 : i64, scratch_operands = 0 : i64, tpu.core_type = #tpu.core_type<tc>, window_params = [{transform_indices = @transform_0, window_bounds = array<i64: 1>}, {transform_indices = @transform_1, window_bounds = array<i64: 2, 1024>}, {transform_indices = @transform_2, window_bounds = array<i64: 2, 1024>}, {transform_indices = @transform_3, window_bounds = array<i64: 2, 1024>}]} {
    %c0 = arith.constant 0 : index
    %c0_0 = arith.constant 0 : index
    %0 = vector.load %arg2[%c0, %c0_0] : memref<2x1024xf32, #tpu.memory_space<vmem>>, vector<2x1024xf32>
    %c0_1 = arith.constant 0 : index
    %1 = memref.load %arg1[%c0_1] : memref<1xf32, #tpu.memory_space<smem>>
    %c0_2 = arith.constant 0 : index
    %c0_3 = arith.constant 0 : index
    %2 = vector.load %arg3[%c0_2, %c0_3] : memref<2x1024xf32, #tpu.memory_space<vmem>>, vector<2x1024xf32>
    %3 = vector.broadcast %1 : f32 to vector<2x1024xf32>
    %4 = arith.mulf %3, %2 : vector<2x1024xf32>
    %cst = arith.constant 1.000000e+00 : f32
    %5 = vector.broadcast %cst : f32 to vector<2x1024xf32>
    %6 = arith.addf %5, %4 : vector<2x1024xf32>
    %7 = arith.mulf %0, %6 : vector<2x1024xf32>
    %c0_4 = arith.constant 0 : index
    %c0_5 = arith.constant 0 : index
    %8 = vector.load %arg4[%c0_4, %c0_5] : memref<2x1024xf32, #tpu.memory_space<vmem>>, vector<2x1024xf32>
    tpu.vector_store %arg4[%c0_4, %c0_5], %7 {strides = array<i32>} : memref<2x1024xf32, #tpu.memory_space<vmem>>, vector<2x1024xf32>,
    return
  }
  func.func @transform_0(%arg0: i32) -> i32 {
    %c0_i32 = arith.constant 0 : i32
    %c0_i32_0 = arith.constant 0 : i32
    return %c0_i32 : i32
  }
  func.func @transform_1(%arg0: i32) -> (i32, i32) {
    %c0_i32 = arith.constant 0 : i32
    %c0_i32_0 = arith.constant 0 : i32
    return %arg0, %c0_i32 : i32, i32
  }
  func.func @transform_2(%arg0: i32) -> (i32, i32) {
    %c0_i32 = arith.constant 0 : i32
    %c0_i32_0 = arith.constant 0 : i32
    return %arg0, %c0_i32 : i32, i32
  }
  func.func @transform_3(%arg0: i32) -> (i32, i32) {
    %c0_i32 = arith.constant 0 : i32
    %c0_i32_0 = arith.constant 0 : i32
    return %arg0, %c0_i32 : i32, i32
  }
}

</mosaic_0001>

<llo_original>
// kernel: multiplicative_gaussian.1
$region0: #{multiplicative_gaussian.1}
  #allocation0 [shape = 'u32[]', space=smem, size = 0x4, offset = 0x4, fixed_abs, tag = 'smem constant byte address 0x4 - core index']
  #allocation1 [shape = 'u32[72,128]{1,0:T(1,128)}', space=vmem, size = 0x9000, scoped, tag = 'internal scratch']
  #allocation2 [shape = 'f32[1]{0:T(128)S(6)}', space=smem, size = 0x200, scoped, tag = 'scoped memory for multiplicative_gaussian.1']
  %s0 = inlined_call_operand.<no memory space> [shape: f32[1], index: 0, kind: input, shape index: {}]
  %s1 = inlined_call_operand.vmem [shape: f32[2,1024], index: 1, kind: input, shape index: {}]
  %s2 = inlined_call_operand.vmem [shape: f32[2,1024], index: 2, kind: input, shape index: {}]
  %s3 = inlined_call_operand.vmem [shape: f32[2,1024], index: 3, kind: output, shape index: {}]
  %s4 = sld [smem:[#allocation0]]
  $region22: #{multiplicative_gaussian.1} parent=0
    _
  %s6 = ssub.s32 1, %s4
  %s7 = scalar_select 0, %s6, %s4
  %8 = sst [smem:[#allocation2]] %s0
  // Predicated region
  $region2: #{multiplicative_gaussian.1} parent=0 // pred_check
    _
  $region3: #{multiplicative_gaussian.1} parent=0 // pred_check_branch
    %10 = sbr.rel (0) target = $region5
  $region4: #{multiplicative_gaussian.1} parent=0 // pred_region
    _
  $region5: #{multiplicative_gaussian.1} parent=0 // pred_fallthru
    _
  // Predicated region
  $region6: #{multiplicative_gaussian.1} parent=0 // pred_check
    _
  $region7: #{multiplicative_gaussian.1} parent=0 // pred_check_branch
    %12 = sbr.rel (0) target = $region9
  $region8: #{multiplicative_gaussian.1} parent=0 // pred_region
    _
  $region9: #{multiplicative_gaussian.1} parent=0 // pred_fallthru
    _
  // Predicated region
  $region10: #{multiplicative_gaussian.1} parent=0 // pred_check
    _
  $region11: #{multiplicative_gaussian.1} parent=0 // pred_check_branch
    %14 = sbr.rel (0) target = $region13
  $region12: #{multiplicative_gaussian.1} parent=0 // pred_region
    _
  $region13: #{multiplicative_gaussian.1} parent=0 // pred_fallthru
    _
  %v15 = vld [vmem:[%s1] sm:$0xff]
  %v16 = vld [vmem:[%s1 + $0x8] sm:$0xff]
  %s17 = sld [smem:[#allocation2]]
  %v18 = vld [vmem:[%s2] sm:$0xff]
  %v19 = vld [vmem:[%s2 + $0x8] sm:$0xff]
  %v20 = vstv %s17
  %v21 = vmul.f32 %v20, %v18
  %v22 = vmul.f32 %v20, %v19
  %v23 = vadd.f32 %v21, 1.0
  %v24 = vadd.f32 %v22, 1.0
  %v25 = vmul.f32 %v15, %v23
  %v26 = vmul.f32 %v16, %v24
  %27 = vst [vmem:[%s3] sm:$0xff] %v25
  %28 = vst [vmem:[%s3 + $0x8] sm:$0xff] %v26
  // Predicated region
  $region14: #{multiplicative_gaussian.1} parent=0 // pred_check
    _
  $region15: #{multiplicative_gaussian.1} parent=0 // pred_check_branch
    %30 = sbr.rel (0) target = $region17
  $region16: #{multiplicative_gaussian.1} parent=0 // pred_region
    _
  $region17: #{multiplicative_gaussian.1} parent=0 // pred_fallthru
    _
  // Predicated region
  $region18: #{multiplicative_gaussian.1} parent=0 // pred_check
    _
  $region19: #{multiplicative_gaussian.1} parent=0 // pred_check_branch
    %32 = sbr.rel (0) target = $region21
  $region20: #{multiplicative_gaussian.1} parent=0 // pred_region
    _
  $region21: #{multiplicative_gaussian.1} parent=0 // pred_fallthru
    _

</llo_original>
